<compile_context>
chip_gen: v7x
topology: tpu7x:2x2x1
jax: 0.10.0
libtpu: 0.0.40
codegen_flags: <defaults>
</compile_context>

<pallas_src>
import functools

import jax
import jax.numpy as jnp
from jax import lax
from jax.experimental import pallas as pl
from jax.experimental.pallas import tpu as pltpu


# ---------------------------------------------------------------------------
# Fused kernel: in-kernel overlay + (normalize -> matmul -> bias -> ReLU) per
# layer, accumulating goodness = sum over layers[1:] of mean(h^2, axis=1).
# Single grid step; all operands are full-array VMEM blocks.
# ---------------------------------------------------------------------------
def make_ff_forward_kernel(n_layers, output_dim):
    def kernel(*refs):
        x_ref = refs[0]                       # (B, Din)   raw input rows
        out_ref = refs[-1]                    # (L*B, 1)   goodness per (label, batch) row
        wb = refs[1:-1]                       # W0, b0, W1, b1, ...

        L = output_dim
        x = x_ref[...].astype(jnp.float32)    # (B, Din)
        B, Din = x.shape

        # --- overlay_y_on_x, label-independent part: zero label columns ----
        x_max = jnp.max(x)                                        # global max of x
        col = lax.broadcasted_iota(jnp.int32, (B, Din), 1)
        xz = jnp.where(col < L, 0.0, x)                           # (B, Din)

        # --- layer 0 (its goodness is discarded by FFBaseNet.forward) ------
        w0 = wb[0][...]                                           # (Din, D1)
        b0 = wb[1][...]                                           # (1,  D1)
        D1 = w0.shape[1]
        # Row norm is label-independent: ||overlay||^2 = ||xz||^2 + x_max^2.
        ss0 = jnp.sum(xz * xz, axis=1, keepdims=True) + x_max * x_max   # (B, 1)
        # Exact reciprocal = full-precision divide on the VALU (not an EUP
        # vrcp); keeps bit-accuracy vs. the f32 reference's `h / (norm+1e-4)`.
        inv0 = pl.reciprocal(jnp.sqrt(ss0) + 1e-4, approx=False)        # (B, 1)
        shared = jnp.dot(xz * inv0, w0,
                         preferred_element_type=jnp.float32) + b0       # (B, D1)
        # Label-dependent contribution: (x_max / norm) * W0[label, :].
        w0_lab = w0[:L, :]                                        # (L, D1)
        coef = x_max * inv0                                       # (B, 1)
        z0 = shared[None, :, :] + coef[None, :, :] * w0_lab[:, None, :]  # (L, B, D1)
        # Rows become label-major (row = label*B + batch); B == 8 keeps the
        # merge of leading dims sublane-aligned (layout no-op).
        h = jnp.maximum(z0, 0.0).reshape(L * B, D1)               # (L*B, D1)

        # Sum-of-squares of the current layer output: reused as the next
        # layer's norm AND (for layers >= 1) as the goodness numerator.
        ss = jnp.sum(h * h, axis=1, keepdims=True)                # (L*B, 1)
        g = jnp.zeros((L * B, 1), jnp.float32)

        # --- layers 1 .. n-1 ------------------------------------------------
        for li in range(1, n_layers):
            w = wb[2 * li][...]
            b = wb[2 * li + 1][...]
            inv = pl.reciprocal(jnp.sqrt(ss) + 1e-4, approx=False)
            h = jnp.maximum(
                jnp.dot(h * inv, w, preferred_element_type=jnp.float32) + b,
                0.0)
            ss = jnp.sum(h * h, axis=1, keepdims=True)            # goodness + next norm
            g = g + ss * (1.0 / w.shape[1])                       # mean(h^2, axis=1)

        out_ref[...] = g.astype(out_ref.dtype)

    return kernel


# ---------------------------------------------------------------------------
# Wrapper: one fused pallas_call, single grid step, resident weights.
# ---------------------------------------------------------------------------
@functools.partial(jax.jit, static_argnames=("output_dim",))
def ffbasenet_forward(x, params, output_dim):
    """Full FFBaseNet.forward. params: list of (W[Din,Dout], b[1,Dout]).

    Returns (B, output_dim) goodness-per-label.
    """
    B, Din = x.shape
    L = output_dim
    n_layers = len(params)
    R = L * B

    in_specs = [pl.BlockSpec((B, Din), lambda i: (0, 0))]
    flat_wb = []
    for (w, b) in params:
        # Full-array blocks with constant index maps: loaded once, VMEM-resident.
        in_specs.append(pl.BlockSpec(w.shape, lambda i: (0, 0)))
        in_specs.append(pl.BlockSpec(b.shape, lambda i: (0, 0)))
        flat_wb.extend([w, b])

    g_all = pl.pallas_call(
        make_ff_forward_kernel(n_layers, L),
        out_shape=jax.ShapeDtypeStruct((R, 1), jnp.float32),
        grid_spec=pltpu.PrefetchScalarGridSpec(
            num_scalar_prefetch=0,
            grid=(1,),  # single tile: no per-step overhead, no duplicated weight DMA
            in_specs=in_specs,
            out_specs=pl.BlockSpec((R, 1), lambda i: (0, 0)),
        ),
        compiler_params=pltpu.CompilerParams(
            dimension_semantics=("arbitrary",),
        ),
    )(x, *flat_wb)

    # Rows are label-major: (L*B, 1) -> (L, B) -> (B, L).
    return g_all.reshape(L, B).T


# ---------------------------------------------------------------------------
# Pure-JAX reference (mirrors the PyTorch module exactly) for verification.
# ---------------------------------------------------------------------------
def overlay_y_on_x_ref(x, label, output_dim):
    B, D = x.shape
    cols = jnp.arange(D)[None, :]
    x_ = jnp.where(cols < output_dim, 0.0, x)
    x_ = jnp.where(cols == label, jnp.max(x), x_)
    return x_


def ffbasenet_forward_ref(x, params, output_dim):
    def layer(h, w, b):
        norm = jnp.sqrt(jnp.sum(h * h, axis=1, keepdims=True))
        hd = h / (norm + 1e-4)
        return jnp.maximum(hd @ w + b, 0.0)

    out = []
    for label in range(output_dim):
        h = overlay_y_on_x_ref(x, label, output_dim)
        h = layer(h, params[0][0], params[0][1])
        good = []
        for (w, b) in params[1:]:
            h = layer(h, w, b)
            good.append(jnp.mean(h * h, axis=1, keepdims=True))
        out.append(jnp.sum(jnp.concatenate(good, axis=1), axis=1))
    return jnp.stack(out, axis=1)


if __name__ == "__main__":
    # Small, module-consistent shapes: dims=[64, 128, 128, 128], batch=8, 10 labels.
    dims = [64, 128, 128, 128]
    batch = 8
    output_dim = 10

    key = jax.random.PRNGKey(0)
    keys = jax.random.split(key, 2 * (len(dims) - 1) + 1)

    params = []
    for i in range(len(dims) - 1):
        din, dout = dims[i], dims[i + 1]
        bound = 1.0 / (din ** 0.5)   # PyTorch nn.Linear default init scale
        w = jax.random.uniform(keys[2 * i], (din, dout), jnp.float32, -bound, bound)
        b = jax.random.uniform(keys[2 * i + 1], (1, dout), jnp.float32, -bound, bound)
        params.append((w, b))

    x = jax.random.uniform(keys[-1], (batch, dims[0]), jnp.float32)

    result = ffbasenet_forward(x, params, output_dim)
    result = jax.block_until_ready(result)
    assert result.shape == (batch, output_dim), result.shape

    ref = jax.block_until_ready(ffbasenet_forward_ref(x, params, output_dim))
    assert jnp.allclose(result, ref, atol=1e-5, rtol=1e-5), (
        float(jnp.max(jnp.abs(result - ref))))

    print("KERNEL_OK")
</pallas_src>

<mosaic_0001>
module attributes {stable_mosaic.version = 11 : i64} {
  func.func @kernel(%arg0: i32, %arg1: memref<8x64xf32, #tpu.memory_space<vmem>>, %arg2: memref<64x128xf32, #tpu.memory_space<vmem>>, %arg3: memref<1x128xf32, #tpu.memory_space<vmem>>, %arg4: memref<128x128xf32, #tpu.memory_space<vmem>>, %arg5: memref<1x128xf32, #tpu.memory_space<vmem>>, %arg6: memref<128x128xf32, #tpu.memory_space<vmem>>, %arg7: memref<1x128xf32, #tpu.memory_space<vmem>>, %arg8: memref<80x1xf32, #tpu.memory_space<vmem>>) attributes {dimension_semantics = [#tpu.dimension_semantics<arbitrary>], iteration_bounds = array<i64: 1>, scalar_prefetch = 0 : i64, scratch_operands = 0 : i64, tpu.core_type = #tpu.core_type<tc>, window_params = [{pipeline_mode = #tpu.pipeline_mode<synchronous>, transform_indices = @transform_0, window_bounds = array<i64: 8, 64>}, {pipeline_mode = #tpu.pipeline_mode<synchronous>, transform_indices = @transform_1, window_bounds = array<i64: 64, 128>}, {pipeline_mode = #tpu.pipeline_mode<synchronous>, transform_indices = @transform_2, window_bounds = array<i64: 1, 128>}, {pipeline_mode = #tpu.pipeline_mode<synchronous>, transform_indices = @transform_3, window_bounds = array<i64: 128, 128>}, {pipeline_mode = #tpu.pipeline_mode<synchronous>, transform_indices = @transform_4, window_bounds = array<i64: 1, 128>}, {pipeline_mode = #tpu.pipeline_mode<synchronous>, transform_indices = @transform_5, window_bounds = array<i64: 128, 128>}, {pipeline_mode = #tpu.pipeline_mode<synchronous>, transform_indices = @transform_6, window_bounds = array<i64: 1, 128>}, {pipeline_mode = #tpu.pipeline_mode<synchronous>, transform_indices = @transform_7, window_bounds = array<i64: 80, 1>}]} {
    %c0 = arith.constant 0 : index
    %c0_0 = arith.constant 0 : index
    %0 = vector.load %arg1[%c0, %c0_0] : memref<8x64xf32, #tpu.memory_space<vmem>>, vector<8x64xf32>
    %1 = vector.shape_cast %0 : vector<8x64xf32> to vector<1x8x64xf32>
    %cst = arith.constant dense<0xFF800000> : vector<1xf32>
    %2 = vector.multi_reduction <maximumf>, %1, %cst [1, 2] : vector<1x8x64xf32> to vector<1xf32>
    %3 = vector.shape_cast %2 : vector<1xf32> to vector<1x1x1xf32>
    %4 = vector.extract %3[0, 0, 0] : f32 from vector<1x1x1xf32>
    %5 = tpu.iota {dimensions = array<i32: 1>} : vector<8x64xi32>
    %c10_i32 = arith.constant 10 : i32
    %6 = vector.broadcast %c10_i32 : i32 to vector<8x64xi32>
    %7 = arith.cmpi slt, %5, %6 : vector<8x64xi32>
    %cst_1 = arith.constant 0.000000e+00 : f32
    %8 = vector.broadcast %cst_1 : f32 to vector<8x64xf32>
    %9 = arith.select %7, %8, %0 : vector<8x64xi1>, vector<8x64xf32>
    %c0_2 = arith.constant 0 : index
    %c0_3 = arith.constant 0 : index
    %10 = vector.load %arg2[%c0_2, %c0_3] : memref<64x128xf32, #tpu.memory_space<vmem>>, vector<64x128xf32>
    %c0_4 = arith.constant 0 : index
    %c0_5 = arith.constant 0 : index
    %11 = vector.load %arg3[%c0_4, %c0_5] : memref<1x128xf32, #tpu.memory_space<vmem>>, vector<1x128xf32>
    %12 = arith.mulf %9, %9 : vector<8x64xf32>
    %cst_6 = arith.constant dense<0.000000e+00> : vector<8xf32>
    %13 = vector.multi_reduction <add>, %12, %cst_6 [1] : vector<8x64xf32> to vector<8xf32>
    %14 = vector.shape_cast %13 : vector<8xf32> to vector<8x1xf32>
    %15 = arith.mulf %4, %4 : f32
    %16 = vector.broadcast %15 : f32 to vector<8x1xf32>
    %17 = arith.addf %14, %16 : vector<8x1xf32>
    %18 = math.sqrt %17 : vector<8x1xf32>
    %cst_7 = arith.constant 9.99999974E-5 : f32
    %19 = vector.broadcast %cst_7 : f32 to vector<8x1xf32>
    %20 = arith.addf %18, %19 : vector<8x1xf32>
    %21 = tpu.reciprocal %20 : vector<8x1xf32> -> vector<8x1xf32>
    %22 = vector.broadcast %21 : vector<8x1xf32> to vector<8x64xf32>
    %23 = arith.mulf %9, %22 : vector<8x64xf32>
    %cst_8 = arith.constant dense<0.000000e+00> : vector<8x128xf32>
    %24 = tpu.matmul %23, %10, %cst_8 {dimension_numbers = #tpu.dot_dimension_numbers<[1], [0], [0], [1], [0, 0, 1, 1], [], []>} : vector<8x64xf32>, vector<64x128xf32>, vector<8x128xf32> -> vector<8x128xf32>
    %25 = vector.broadcast %11 : vector<1x128xf32> to vector<8x128xf32>
    %26 = arith.addf %24, %25 : vector<8x128xf32>
    %27 = vector.extract_strided_slice %10 {offsets = [0, 0], sizes = [10, 128], strides = [1, 1]} : vector<64x128xf32> to vector<10x128xf32>
    %28 = vector.broadcast %4 : f32 to vector<8x1xf32>
    %29 = arith.mulf %28, %21 : vector<8x1xf32>
    %30 = vector.shape_cast %26 : vector<8x128xf32> to vector<1x8x128xf32>
    %31 = vector.shape_cast %29 : vector<8x1xf32> to vector<1x8x1xf32>
    %32 = vector.shape_cast %27 : vector<10x128xf32> to vector<10x1x128xf32>
    %33 = vector.broadcast %31 : vector<1x8x1xf32> to vector<10x8x128xf32>
    %34 = vector.broadcast %32 : vector<10x1x128xf32> to vector<10x8x128xf32>
    %35 = arith.mulf %33, %34 : vector<10x8x128xf32>
    %36 = vector.broadcast %30 : vector<1x8x128xf32> to vector<10x8x128xf32>
    %37 = arith.addf %36, %35 : vector<10x8x128xf32>
    %cst_9 = arith.constant 0.000000e+00 : f32
    %38 = vector.broadcast %cst_9 : f32 to vector<10x8x128xf32>
    %39 = arith.maximumf %37, %38 : vector<10x8x128xf32>
    %40 = vector.shape_cast %39 : vector<10x8x128xf32> to vector<80x128xf32>
    %41 = arith.mulf %40, %40 : vector<80x128xf32>
    %cst_10 = arith.constant dense<0.000000e+00> : vector<80xf32>
    %42 = vector.multi_reduction <add>, %41, %cst_10 [1] : vector<80x128xf32> to vector<80xf32>
    %43 = vector.shape_cast %42 : vector<80xf32> to vector<80x1xf32>
    %cst_11 = arith.constant 0.000000e+00 : f32
    %44 = vector.broadcast %cst_11 : f32 to vector<80x1xf32>
    %c0_12 = arith.constant 0 : index
    %c0_13 = arith.constant 0 : index
    %45 = vector.load %arg4[%c0_12, %c0_13] : memref<128x128xf32, #tpu.memory_space<vmem>>, vector<128x128xf32>
    %c0_14 = arith.constant 0 : index
    %c0_15 = arith.constant 0 : index
    %46 = vector.load %arg5[%c0_14, %c0_15] : memref<1x128xf32, #tpu.memory_space<vmem>>, vector<1x128xf32>
    %47 = math.sqrt %43 : vector<80x1xf32>
    %cst_16 = arith.constant 9.99999974E-5 : f32
    %48 = vector.broadcast %cst_16 : f32 to vector<80x1xf32>
    %49 = arith.addf %47, %48 : vector<80x1xf32>
    %50 = tpu.reciprocal %49 : vector<80x1xf32> -> vector<80x1xf32>
    %51 = vector.broadcast %50 : vector<80x1xf32> to vector<80x128xf32>
    %52 = arith.mulf %40, %51 : vector<80x128xf32>
    %cst_17 = arith.constant dense<0.000000e+00> : vector<80x128xf32>
    %53 = tpu.matmul %52, %45, %cst_17 {dimension_numbers = #tpu.dot_dimension_numbers<[1], [0], [0], [1], [0, 0, 1, 1], [], []>} : vector<80x128xf32>, vector<128x128xf32>, vector<80x128xf32> -> vector<80x128xf32>
    %54 = vector.broadcast %46 : vector<1x128xf32> to vector<80x128xf32>
    %55 = arith.addf %53, %54 : vector<80x128xf32>
    %cst_18 = arith.constant 0.000000e+00 : f32
    %56 = vector.broadcast %cst_18 : f32 to vector<80x128xf32>
    %57 = arith.maximumf %55, %56 : vector<80x128xf32>
    %58 = arith.mulf %57, %57 : vector<80x128xf32>
    %cst_19 = arith.constant dense<0.000000e+00> : vector<80xf32>
    %59 = vector.multi_reduction <add>, %58, %cst_19 [1] : vector<80x128xf32> to vector<80xf32>
    %60 = vector.shape_cast %59 : vector<80xf32> to vector<80x1xf32>
    %cst_20 = arith.constant 7.812500e-03 : f32
    %61 = vector.broadcast %cst_20 : f32 to vector<80x1xf32>
    %62 = arith.mulf %60, %61 : vector<80x1xf32>
    %63 = arith.addf %44, %62 : vector<80x1xf32>
    %c0_21 = arith.constant 0 : index
    %c0_22 = arith.constant 0 : index
    %64 = vector.load %arg6[%c0_21, %c0_22] : memref<128x128xf32, #tpu.memory_space<vmem>>, vector<128x128xf32>
    %c0_23 = arith.constant 0 : index
    %c0_24 = arith.constant 0 : index
    %65 = vector.load %arg7[%c0_23, %c0_24] : memref<1x128xf32, #tpu.memory_space<vmem>>, vector<1x128xf32>
    %66 = math.sqrt %60 : vector<80x1xf32>
    %cst_25 = arith.constant 9.99999974E-5 : f32
    %67 = vector.broadcast %cst_25 : f32 to vector<80x1xf32>
    %68 = arith.addf %66, %67 : vector<80x1xf32>
    %69 = tpu.reciprocal %68 : vector<80x1xf32> -> vector<80x1xf32>
    %70 = vector.broadcast %69 : vector<80x1xf32> to vector<80x128xf32>
    %71 = arith.mulf %57, %70 : vector<80x128xf32>
    %cst_26 = arith.constant dense<0.000000e+00> : vector<80x128xf32>
    %72 = tpu.matmul %71, %64, %cst_26 {dimension_numbers = #tpu.dot_dimension_numbers<[1], [0], [0], [1], [0, 0, 1, 1], [], []>} : vector<80x128xf32>, vector<128x128xf32>, vector<80x128xf32> -> vector<80x128xf32>
    %73 = vector.broadcast %65 : vector<1x128xf32> to vector<80x128xf32>
    %74 = arith.addf %72, %73 : vector<80x128xf32>
    %cst_27 = arith.constant 0.000000e+00 : f32
    %75 = vector.broadcast %cst_27 : f32 to vector<80x128xf32>
    %76 = arith.maximumf %74, %75 : vector<80x128xf32>
    %77 = arith.mulf %76, %76 : vector<80x128xf32>
    %cst_28 = arith.constant dense<0.000000e+00> : vector<80xf32>
    %78 = vector.multi_reduction <add>, %77, %cst_28 [1] : vector<80x128xf32> to vector<80xf32>
    %79 = vector.shape_cast %78 : vector<80xf32> to vector<80x1xf32>
    %cst_29 = arith.constant 7.812500e-03 : f32
    %80 = vector.broadcast %cst_29 : f32 to vector<80x1xf32>
    %81 = arith.mulf %79, %80 : vector<80x1xf32>
    %82 = arith.addf %63, %81 : vector<80x1xf32>
    %c0_30 = arith.constant 0 : index
    %c0_31 = arith.constant 0 : index
    %83 = vector.load %arg8[%c0_30, %c0_31] : memref<80x1xf32, #tpu.memory_space<vmem>>, vector<80x1xf32>
    tpu.vector_store %arg8[%c0_30, %c0_31], %82 {strides = array<i32>} : memref<80x1xf32, #tpu.memory_space<vmem>>, vector<80x1xf32>,
    return
  }
  func.func @transform_0(%arg0: i32) -> (i32, i32) {
    %c0_i32 = arith.constant 0 : i32
    %c0_i32_0 = arith.constant 0 : i32
    %c0_i32_1 = arith.constant 0 : i32
    return %c0_i32, %c0_i32_0 : i32, i32
  }
  func.func @transform_1(%arg0: i32) -> (i32, i32) {
    %c0_i32 = arith.constant 0 : i32
    %c0_i32_0 = arith.constant 0 : i32
    %c0_i32_1 = arith.constant 0 : i32
    return %c0_i32, %c0_i32_0 : i32, i32
  }
  func.func @transform_2(%arg0: i32) -> (i32, i32) {
    %c0_i32 = arith.constant 0 : i32
    %c0_i32_0 = arith.constant 0 : i32
    %c0_i32_1 = arith.constant 0 : i32
    return %c0_i32, %c0_i32_0 : i32, i32
  }
  func.func @transform_3(%arg0: i32) -> (i32, i32) {
    %c0_i32 = arith.constant 0 : i32
    %c0_i32_0 = arith.constant 0 : i32
    %c0_i32_1 = arith.constant 0 : i32
    return %c0_i32, %c0_i32_0 : i32, i32
  }
  func.func @transform_4(%arg0: i32) -> (i32, i32) {
    %c0_i32 = arith.constant 0 : i32
    %c0_i32_0 = arith.constant 0 : i32
    %c0_i32_1 = arith.constant 0 : i32
    return %c0_i32, %c0_i32_0 : i32, i32
  }
  func.func @transform_5(%arg0: i32) -> (i32, i32) {
    %c0_i32 = arith.constant 0 : i32
    %c0_i32_0 = arith.constant 0 : i32
    %c0_i32_1 = arith.constant 0 : i32
    return %c0_i32, %c0_i32_0 : i32, i32
  }
  func.func @transform_6(%arg0: i32) -> (i32, i32) {
    %c0_i32 = arith.constant 0 : i32
    %c0_i32_0 = arith.constant 0 : i32
    %c0_i32_1 = arith.constant 0 : i32
    return %c0_i32, %c0_i32_0 : i32, i32
  }
  func.func @transform_7(%arg0: i32) -> (i32, i32) {
    %c0_i32 = arith.constant 0 : i32
    %c0_i32_0 = arith.constant 0 : i32
    %c0_i32_1 = arith.constant 0 : i32
    return %c0_i32, %c0_i32_0 : i32, i32
  }
}

</mosaic_0001>

<llo_original>
// kernel: ffbasenet_forward.1
$region0: #{ffbasenet_forward.1}
  #allocation0 [shape = 'u32[]', space=smem, size = 0x4, offset = 0x4, fixed_abs, tag = 'smem constant byte address 0x4 - core index']
  #allocation1 [shape = 'u32[144,128]{1,0:T(1,128)}', space=vmem, size = 0x12000, scoped, tag = 'internal scratch']
  %s0 = inlined_call_operand.hbm [shape: f32[8,64], index: 0, kind: input, shape index: {}]
  %s1 = inlined_call_operand.hbm [shape: f32[64,128], index: 1, kind: input, shape index: {}]
  %s2 = inlined_call_operand.vmem [shape: f32[1,128], index: 2, kind: input, shape index: {}]
  %s3 = inlined_call_operand.hbm [shape: f32[128,128], index: 3, kind: input, shape index: {}]
  %s4 = inlined_call_operand.vmem [shape: f32[1,128], index: 4, kind: input, shape index: {}]
  %s5 = inlined_call_operand.hbm [shape: f32[128,128], index: 5, kind: input, shape index: {}]
  %s6 = inlined_call_operand.vmem [shape: f32[1,128], index: 6, kind: input, shape index: {}]
  %s7 = inlined_call_operand.vmem [shape: f32[80,1], index: 7, kind: output, shape index: {}]
  %s8 = sld [smem:[#allocation0]]
  $region54: #{ffbasenet_forward.1} parent=0
    _
  %s10 = ssub.s32 1, %s8
  %s11 = scalar_select 0, %s10, %s8
  $region1: #{ffbasenet_forward.1} parent=0
    #allocation2 [shape = 'u8[4096]{0}', space=vmem, size = 0x1000, scoped, tag = 'input window, operand 0, single buffered']
    #allocation3 [shape = 's32[1]{0}', space=sflag, size = 0x4, scoped, tag = 'scoped memory for ffbasenet_forward.1']
    #allocation4 [shape = 'u8[32768]{0}', space=vmem, size = 0x8000, scoped, tag = 'input window, operand 1, single buffered']
    #allocation5 [shape = 's32[1]{0}', space=sflag, size = 0x4, scoped, tag = 'scoped memory for ffbasenet_forward.1']
    #allocation6 [shape = 'u8[65536]{0}', space=vmem, size = 0x10000, scoped, tag = 'input window, operand 3, single buffered']
    #allocation7 [shape = 'u8[65536]{0}', space=vmem, size = 0x10000, scoped, tag = 'input window, operand 5, single buffered']
    #allocation8 [shape = 's32[1]{0}', space=sflag, size = 0x4, scoped, tag = 'scoped memory for ffbasenet_forward.1']
    %12 = vsyncpa [#allocation3], 0
    %13 = vsyncpa [#allocation5], 0
    %14 = vsyncpa [#allocation8], 0
    // Predicated region
    $region2: #{ffbasenet_forward.1} parent=1 // pred_check
      _
    $region3: #{ffbasenet_forward.1} parent=1 // pred_check_branch
      %16 = sbr.rel (0) target = $region5
    $region4: #{ffbasenet_forward.1} parent=1 // pred_region
      %s18 = ssub.s32 128, 128
      %19 = vsyncadd [#allocation3], %s18
      %s21 = sshll.u32 [#allocation2], 4
      %s22 = int_to_ptr.vmem [resolvable:$true] %s21
      %24 = dma.hbm_to_vmem [thread:$0]  %s0, 128, %s22, [#allocation3]
    $region5: #{ffbasenet_forward.1} parent=1 // pred_fallthru
      _
    // Predicated region
    $region6: #{ffbasenet_forward.1} parent=1 // pred_check
      _
    $region7: #{ffbasenet_forward.1} parent=1 // pred_check_branch
      %26 = sbr.rel (0) target = $region9
    $region8: #{ffbasenet_forward.1} parent=1 // pred_region
      %s28 = ssub.s32 1024, 1024
      %29 = vsyncadd [#allocation5], %s28
      %s30 = sshll.u32 [#allocation4], 4
      %s31 = int_to_ptr.vmem [resolvable:$true] %s30
      %36 = dma.hbm_to_vmem [thread:$0]  %s1, 1024, %s31, [#allocation5], 128, 128, 8
    $region9: #{ffbasenet_forward.1} parent=1 // pred_fallthru
      _
    // Predicated region
    $region10: #{ffbasenet_forward.1} parent=1 // pred_check
      _
    $region11: #{ffbasenet_forward.1} parent=1 // pred_check_branch
      %38 = sbr.rel (0) target = $region13
    $region12: #{ffbasenet_forward.1} parent=1 // pred_region
      _
    $region13: #{ffbasenet_forward.1} parent=1 // pred_fallthru
      _
    // Predicated region
    $region14: #{ffbasenet_forward.1} parent=1 // pred_check
      _
    $region15: #{ffbasenet_forward.1} parent=1 // pred_check_branch
      %40 = sbr.rel (0) target = $region17
    $region16: #{ffbasenet_forward.1} parent=1 // pred_region
      %s42 = ssub.s32 2048, 2048
      %43 = vsyncadd [#allocation5], %s42
      %s44 = sshll.u32 [#allocation6], 4
      %s45 = int_to_ptr.vmem [resolvable:$true] %s44
      %50 = dma.hbm_to_vmem [thread:$0]  %s3, 2048, %s45, [#allocation5], 128, 128, 8
    $region17: #{ffbasenet_forward.1} parent=1 // pred_fallthru
      _
    // Predicated region
    $region18: #{ffbasenet_forward.1} parent=1 // pred_check
      _
    $region19: #{ffbasenet_forward.1} parent=1 // pred_check_branch
      %52 = sbr.rel (0) target = $region21
    $region20: #{ffbasenet_forward.1} parent=1 // pred_region
      _
    $region21: #{ffbasenet_forward.1} parent=1 // pred_fallthru
      _
    // Predicated region
    $region22: #{ffbasenet_forward.1} parent=1 // pred_check
      _
    $region23: #{ffbasenet_forward.1} parent=1 // pred_check_branch
      %54 = sbr.rel (0) target = $region25
    $region24: #{ffbasenet_forward.1} parent=1 // pred_region
      %s56 = ssub.s32 2048, 2048
      %57 = vsyncadd [#allocation8], %s56
      %s58 = sshll.u32 [#allocation7], 4
      %s59 = int_to_ptr.vmem [resolvable:$true] %s58
      %64 = dma.hbm_to_vmem [thread:$0]  %s5, 2048, %s59, [#allocation8], 128, 128, 8
    $region25: #{ffbasenet_forward.1} parent=1 // pred_fallthru
      _
    // Predicated region
    $region26: #{ffbasenet_forward.1} parent=1 // pred_check
      _
    $region27: #{ffbasenet_forward.1} parent=1 // pred_check_branch
      %66 = sbr.rel (0) target = $region29
    $region28: #{ffbasenet_forward.1} parent=1 // pred_region
      _
    $region29: #{ffbasenet_forward.1} parent=1 // pred_fallthru
      _
    // Predicated region
    $region30: #{ffbasenet_forward.1} parent=1 // pred_check
      _
    $region31: #{ffbasenet_forward.1} parent=1 // pred_check_branch
      %68 = sbr.rel (0) target = $region33
    $region32: #{ffbasenet_forward.1} parent=1 // pred_region
      %69 = dma.done [#allocation3], 128
    $region33: #{ffbasenet_forward.1} parent=1 // pred_fallthru
      _
    // Predicated region
    $region34: #{ffbasenet_forward.1} parent=1 // pred_check
      _
    $region35: #{ffbasenet_forward.1} parent=1 // pred_check_branch
      %71 = sbr.rel (0) target = $region37
    $region36: #{ffbasenet_forward.1} parent=1 // pred_region
      %72 = dma.done [#allocation5], 1024
    $region37: #{ffbasenet_forward.1} parent=1 // pred_fallthru
      _
    // Predicated region
    $region38: #{ffbasenet_forward.1} parent=1 // pred_check
      _
    $region39: #{ffbasenet_forward.1} parent=1 // pred_check_branch
      %74 = sbr.rel (0) target = $region41
    $region40: #{ffbasenet_forward.1} parent=1 // pred_region
      %75 = dma.done [#allocation5], 2048
    $region41: #{ffbasenet_forward.1} parent=1 // pred_fallthru
      _
    // Predicated region
    $region42: #{ffbasenet_forward.1} parent=1 // pred_check
      _
    $region43: #{ffbasenet_forward.1} parent=1 // pred_check_branch
      %77 = sbr.rel (0) target = $region45
    $region44: #{ffbasenet_forward.1} parent=1 // pred_region
      %78 = dma.done [#allocation8], 2048
    $region45: #{ffbasenet_forward.1} parent=1 // pred_fallthru
      _
    %v79 = vld [vmem:[#allocation2] sm:$0xff]
    %vm80 = vcmask 523264
    %v81 = vsel %vm80, %v79, -inf
    %82 = vmax.xlane.f32.xlu0 %v81
    %v83 = vpop.xlane.xlu0 %82
    %v84 = vrot.slane %v83, 4
    %v85 = vmax.f32 %v83, %v84
    %v86 = vrot.slane %v85, 2
    %v87 = vmax.f32 %v85, %v86
    %v88 = vrot.slane %v87, 1
    %v89 = vmax.f32 %v87, %v88
    %s90 = vtos %v89
    %v91 = vlaneseq
    %v92 = vand.u32 %v91, 127
    %vm93 = vcmp.lt.s32.totalorder %v92, 10
    %v94 = vsel %vm93, 0.0, %v79
    %v95 = vld [vmem:[#allocation4] sm:$0xff]
    %v96 = vld [vmem:[#allocation4 + $0x8] sm:$0xff]
    %v97 = vld [vmem:[#allocation4 + $0x10] sm:$0xff]
    %v98 = vld [vmem:[#allocation4 + $0x18] sm:$0xff]
    %v99 = vld [vmem:[#allocation4 + $0x20] sm:$0xff]
    %v100 = vld [vmem:[#allocation4 + $0x28] sm:$0xff]
    %v101 = vld [vmem:[#allocation4 + $0x30] sm:$0xff]
    %v102 = vld [vmem:[#allocation4 + $0x38] sm:$0xff]
    %v103 = vld [vmem:[%s2] sm:$0x1]
    %v104 = vmul.f32 %v94, %v94
    %v105 = vsel %vm80, %v104, 0.0
    %106 = vadd.xlane.f32.xlu0 %v105
    %v107 = vpop.xlane.xlu0 %106
    %s108 = smul.f32 %s90, %s90
    %v109 = vstv %s108
    %v110 = vadd.f32 %v107, %v109
    %v111 = vrsqrt.pop %v110
    %v112 = vmul.f32 %v110, %v111
    %vm113 = vcmp.eq.f32.partialorder %v110, inf
    %v114 = vsel %vm113, %v110, %v112
    %vm115 = vcmp.eq.f32.partialorder %v110, 0.0
    %v116 = vand.u32 %v110, 2147483648
    %v117 = vsel %vm115, %v116, %v114
    %v118 = vadd.f32 %v117, 0.0001
    %v119 = vrcp.pop %v118
    %v120 = vmul.f32 %v94, %v119
    %v122 = vlaneseq
    %v123 = vshrl.u32 %v122, 7
    %v124 = vsub.s32 0, %v123
    %v125 = vrot.slane %v103, %v124
    %v128 = vsel %vm80, %v120, 0
    %130 = vmatprep.subr.mxu0 0.0
    %131 = vmatpush1.msra.mxu0 %v95
    %132 = vmatprep.subr.mxu0 0.0
    %133 = vmatpush1.msra.mxu0 %v96
    %134 = vmatprep.subr.mxu0 0.0
    %135 = vmatpush1.msra.mxu0 %v97
    %136 = vmatprep.subr.mxu0 0.0
    %137 = vmatpush1.msra.mxu0 %v98
    %138 = vmatprep.subr.mxu0 0.0
    %139 = vmatpush1.msra.mxu0 %v99
    %140 = vmatprep.subr.mxu0 0.0
    %141 = vmatpush1.msra.mxu0 %v100
    %142 = vmatprep.subr.mxu0 0.0
    %143 = vmatpush1.msra.mxu0 %v101
    %144 = vmatprep.subr.mxu0 0.0
    %145 = vmatpush1.msra.mxu0 %v102
    %146 = vmatprep.subr.mxu0 0.0
    %147 = vmatpush1.msra.mxu0 0.0
    %148 = vmatprep.subr.mxu0 0.0
    %149 = vmatpush1.msra.mxu0 0.0
    %150 = vmatprep.subr.mxu0 0.0
    %151 = vmatpush1.msra.mxu0 0.0
    %152 = vmatprep.subr.mxu0 0.0
    %153 = vmatpush1.msra.mxu0 0.0
    %154 = vmatprep.subr.mxu0 0.0
    %155 = vmatpush1.msra.mxu0 0.0
    %156 = vmatprep.subr.mxu0 0.0
    %157 = vmatpush1.msra.mxu0 0.0
    %158 = vmatprep.subr.mxu0 0.0
    %159 = vmatpush1.msra.mxu0 0.0
    %160 = vmatprep.subr.mxu0 0.0
    %161 = vmatpush1.msra.mxu0 0.0
    %162 = vmatprep.subr.mxu0 0.0
    %163 = vmatpush1.msra.mxu0 0.0
    %164 = vmatprep.subr.mxu0 0.0
    %165 = vmatpush1.msra.mxu0 0.0
    %166 = vmatprep.subr.mxu0 0.0
    %167 = vmatpush1.msra.mxu0 0.0
    %168 = vmatprep.subr.mxu0 0.0
    %169 = vmatpush1.msra.mxu0 0.0
    %170 = vmatprep.subr.mxu0 0.0
    %171 = vmatpush1.msra.mxu0 0.0
    %172 = vmatprep.subr.mxu0 0.0
    %173 = vmatpush1.msra.mxu0 0.0
    %174 = vmatprep.subr.mxu0 0.0
    %175 = vmatpush1.msra.mxu0 0.0
    %176 = vmatprep.subr.mxu0 0.0
    %177 = vmatpush1.msra.mxu0 0.0
    %178 = vmatprep.subr.mxu0 0.0
    %179 = vmatpush1.msra.mxu0 0.0
    %180 = vmatprep.subr.mxu0 0.0
    %181 = vmatpush1.msra.mxu0 0.0
    %182 = vmatprep.subr.mxu0 0.0
    %183 = vmatpush1.msra.mxu0 0.0
    %184 = vmatprep.subr.mxu0 0.0
    %185 = vmatpush1.msra.mxu0 0.0
    %186 = vmatprep.subr.mxu0 0.0
    %187 = vmatpush1.msra.mxu0 0.0
    %188 = vmatprep.subr.mxu0 0.0
    %189 = vmatpush1.msra.mxu0 0.0
    %190 = vmatprep.subr.mxu0 0.0
    %191 = vmatpush1.msra.mxu0 0.0
    %192 = vmatprep.subr.mxu0 0.0
    %193 = vmatpush1.msra.mxu0 0.0
    %194 = vmatprep.mubr.f32.mxu0 0.0
    %195 = vmatmul.mubr.f32.gmra.mrb[0].mxu0 %v128
    %v196 = vpop.f32.mrb[0].mxu0
    %v197 = vadd.f32 %v125, %v196
    %v198 = vpop.f32.mrb[0].mxu0
    %199 = vdwg.mxu0
    %v200 = vstv %s90
    %v201 = vmul.f32 %v200, %v119
    %v204 = vcombine.high %v95, %v95
    %v206 = vunpack.c.l.s4 1966171168
    %v207 = vunpack.c.0.s8 %v206
    %v208 = vlaneseq
    %v209 = vshrl.u32 %v208, 7
    %v210 = vsub.s32 %v207, %v209
    %v211 = vrot.slane %v95, %v210
    %v213 = vunpack.c.l.s4 1966171168
    %v214 = vunpack.c.0.s8 %v213
    %v215 = vlaneseq
    %v216 = vshrl.u32 %v215, 7
    %v217 = vsub.s32 %v214, %v216
    %v218 = vrot.slane %v204, %v217
    %v219 = vcombine.high %v211, %v211
    %v220 = vcombine.high %v218, %v218
    %v222 = vunpack.c.l.s4 1966171168
    %v223 = vunpack.c.0.s8 %v222
    %v224 = vlaneseq
    %v225 = vshrl.u32 %v224, 7
    %v226 = vsub.s32 %v223, %v225
    %v227 = vrot.slane %v211, %v226
    %v229 = vunpack.c.l.s4 1966171168
    %v230 = vunpack.c.0.s8 %v229
    %v231 = vlaneseq
    %v232 = vshrl.u32 %v231, 7
    %v233 = vsub.s32 %v230, %v232
    %v234 = vrot.slane %v218, %v233
    %v236 = vunpack.c.l.s4 1966171168
    %v237 = vunpack.c.0.s8 %v236
    %v238 = vlaneseq
    %v239 = vshrl.u32 %v238, 7
    %v240 = vsub.s32 %v237, %v239
    %v241 = vrot.slane %v219, %v240
    %v243 = vunpack.c.l.s4 1966171168
    %v244 = vunpack.c.0.s8 %v243
    %v245 = vlaneseq
    %v246 = vshrl.u32 %v245, 7
    %v247 = vsub.s32 %v244, %v246
    %v248 = vrot.slane %v220, %v247
    %v249 = vcombine.high %v227, %v227
    %v250 = vcombine.high %v234, %v234
    %v251 = vcombine.high %v241, %v241
    %v252 = vcombine.high %v248, %v248
    %v254 = vunpack.c.l.s4 1966171168
    %v255 = vunpack.c.0.s8 %v254
    %v256 = vlaneseq
    %v257 = vshrl.u32 %v256, 7
    %v258 = vsub.s32 %v255, %v257
    %v259 = vrot.slane %v96, %v258
    %v260 = vcombine.high %v259, %v259
    %v262 = vunpack.c.l.s4 1966171168
    %v263 = vunpack.c.0.s8 %v262
    %v264 = vlaneseq
    %v265 = vshrl.u32 %v264, 7
    %v266 = vsub.s32 %v263, %v265
    %v267 = vrot.slane %v259, %v266
    %v269 = vunpack.c.l.s4 1966171168
    %v270 = vunpack.c.0.s8 %v269
    %v271 = vlaneseq
    %v272 = vshrl.u32 %v271, 7
    %v273 = vsub.s32 %v270, %v272
    %v274 = vrot.slane %v260, %v273
    %v275 = vlaneseq
    %v276 = vshrl.u32 %v275, 7
    %v277 = vsub.s32 0, %v276
    %v278 = vrot.slane %v227, %v277
    %v279 = vlaneseq
    %v280 = vshrl.u32 %v279, 7
    %v281 = vsub.s32 0, %v280
    %v282 = vrot.slane %v241, %v281
    %v283 = vlaneseq
    %v284 = vshrl.u32 %v283, 7
    %v285 = vsub.s32 0, %v284
    %v286 = vrot.slane %v249, %v285
    %v287 = vlaneseq
    %v288 = vshrl.u32 %v287, 7
    %v289 = vsub.s32 0, %v288
    %v290 = vrot.slane %v251, %v289
    %v291 = vlaneseq
    %v292 = vshrl.u32 %v291, 7
    %v293 = vsub.s32 0, %v292
    %v294 = vrot.slane %v234, %v293
    %v295 = vlaneseq
    %v296 = vshrl.u32 %v295, 7
    %v297 = vsub.s32 0, %v296
    %v298 = vrot.slane %v248, %v297
    %v299 = vlaneseq
    %v300 = vshrl.u32 %v299, 7
    %v301 = vsub.s32 0, %v300
    %v302 = vrot.slane %v250, %v301
    %v303 = vlaneseq
    %v304 = vshrl.u32 %v303, 7
    %v305 = vsub.s32 0, %v304
    %v306 = vrot.slane %v252, %v305
    %v307 = vlaneseq
    %v308 = vshrl.u32 %v307, 7
    %v309 = vsub.s32 0, %v308
    %v310 = vrot.slane %v267, %v309
    %v311 = vlaneseq
    %v312 = vshrl.u32 %v311, 7
    %v313 = vsub.s32 0, %v312
    %v314 = vrot.slane %v274, %v313
    %v325 = vmul.f32 %v201, %v278
    %v326 = vmul.f32 %v201, %v282
    %v327 = vmul.f32 %v201, %v286
    %v328 = vmul.f32 %v201, %v290
    %v329 = vmul.f32 %v201, %v294
    %v330 = vmul.f32 %v201, %v298
    %v331 = vmul.f32 %v201, %v302
    %v332 = vmul.f32 %v201, %v306
    %v333 = vmul.f32 %v201, %v310
    %v334 = vmul.f32 %v201, %v314
    %v335 = vadd.f32 %v197, %v325
    %v336 = vadd.f32 %v197, %v326
    %v337 = vadd.f32 %v197, %v327
    %v338 = vadd.f32 %v197, %v328
    %v339 = vadd.f32 %v197, %v329
    %v340 = vadd.f32 %v197, %v330
    %v341 = vadd.f32 %v197, %v331
    %v342 = vadd.f32 %v197, %v332
    %v343 = vadd.f32 %v197, %v333
    %v344 = vadd.f32 %v197, %v334
    %v345 = vmax.f32 %v335, 0.0
    %v346 = vmax.f32 %v336, 0.0
    %v347 = vmax.f32 %v337, 0.0
    %v348 = vmax.f32 %v338, 0.0
    %v349 = vmax.f32 %v339, 0.0
    %v350 = vmax.f32 %v340, 0.0
    %v351 = vmax.f32 %v341, 0.0
    %v352 = vmax.f32 %v342, 0.0
    %v353 = vmax.f32 %v343, 0.0
    %v354 = vmax.f32 %v344, 0.0
    %v355 = vmul.f32 %v345, %v345
    %v356 = vmul.f32 %v346, %v346
    %v357 = vmul.f32 %v347, %v347
    %v358 = vmul.f32 %v348, %v348
    %v359 = vmul.f32 %v349, %v349
    %v360 = vmul.f32 %v350, %v350
    %v361 = vmul.f32 %v351, %v351
    %v362 = vmul.f32 %v352, %v352
    %v363 = vmul.f32 %v353, %v353
    %v364 = vmul.f32 %v354, %v354
    %365 = vadd.xlane.f32.xlu0 %v355
    %v366 = vpop.xlane.xlu0 %365
    %367 = vadd.xlane.f32.xlu0 %v356
    %v368 = vpop.xlane.xlu0 %367
    %369 = vadd.xlane.f32.xlu0 %v357
    %v370 = vpop.xlane.xlu0 %369
    %371 = vadd.xlane.f32.xlu0 %v358
    %v372 = vpop.xlane.xlu0 %371
    %373 = vadd.xlane.f32.xlu0 %v359
    %v374 = vpop.xlane.xlu0 %373
    %375 = vadd.xlane.f32.xlu0 %v360
    %v376 = vpop.xlane.xlu0 %375
    %377 = vadd.xlane.f32.xlu0 %v361
    %v378 = vpop.xlane.xlu0 %377
    %379 = vadd.xlane.f32.xlu0 %v362
    %v380 = vpop.xlane.xlu0 %379
    %381 = vadd.xlane.f32.xlu0 %v363
    %v382 = vpop.xlane.xlu0 %381
    %383 = vadd.xlane.f32.xlu0 %v364
    %v384 = vpop.xlane.xlu0 %383
    %v385 = vld [vmem:[#allocation6] sm:$0xff]
    %v386 = vld [vmem:[#allocation6 + $0x8] sm:$0xff]
    %v387 = vld [vmem:[#allocation6 + $0x10] sm:$0xff]
    %v388 = vld [vmem:[#allocation6 + $0x18] sm:$0xff]
    %v389 = vld [vmem:[#allocation6 + $0x20] sm:$0xff]
    %v390 = vld [vmem:[#allocation6 + $0x28] sm:$0xff]
    %v391 = vld [vmem:[#allocation6 + $0x30] sm:$0xff]
    %v392 = vld [vmem:[#allocation6 + $0x38] sm:$0xff]
    %v393 = vld [vmem:[#allocation6 + $0x40] sm:$0xff]
    %v394 = vld [vmem:[#allocation6 + $0x48] sm:$0xff]
    %v395 = vld [vmem:[#allocation6 + $0x50] sm:$0xff]
    %v396 = vld [vmem:[#allocation6 + $0x58] sm:$0xff]
    %v397 = vld [vmem:[#allocation6 + $0x60] sm:$0xff]
    %v398 = vld [vmem:[#allocation6 + $0x68] sm:$0xff]
    %v399 = vld [vmem:[#allocation6 + $0x70] sm:$0xff]
    %v400 = vld [vmem:[#allocation6 + $0x78] sm:$0xff]
    %v401 = vld [vmem:[%s4] sm:$0x1]
    %v402 = vrsqrt.pop %v366
    %v403 = vmul.f32 %v366, %v402
    %vm404 = vcmp.eq.f32.partialorder %v366, inf
    %v405 = vsel %vm404, %v366, %v403
    %vm406 = vcmp.eq.f32.partialorder %v366, 0.0
    %v407 = vand.u32 %v366, 2147483648
    %v408 = vsel %vm406, %v407, %v405
    %v409 = vrsqrt.pop %v368
    %v410 = vmul.f32 %v368, %v409
    %vm411 = vcmp.eq.f32.partialorder %v368, inf
    %v412 = vsel %vm411, %v368, %v410
    %vm413 = vcmp.eq.f32.partialorder %v368, 0.0
    %v414 = vand.u32 %v368, 2147483648
    %v415 = vsel %vm413, %v414, %v412
    %v416 = vrsqrt.pop %v370
    %v417 = vmul.f32 %v370, %v416
    %vm418 = vcmp.eq.f32.partialorder %v370, inf
    %v419 = vsel %vm418, %v370, %v417
    %vm420 = vcmp.eq.f32.partialorder %v370, 0.0
    %v421 = vand.u32 %v370, 2147483648
    %v422 = vsel %vm420, %v421, %v419
    %v423 = vrsqrt.pop %v372
    %v424 = vmul.f32 %v372, %v423
    %vm425 = vcmp.eq.f32.partialorder %v372, inf
    %v426 = vsel %vm425, %v372, %v424
    %vm427 = vcmp.eq.f32.partialorder %v372, 0.0
    %v428 = vand.u32 %v372, 2147483648
    %v429 = vsel %vm427, %v428, %v426
    %v430 = vrsqrt.pop %v374
    %v431 = vmul.f32 %v374, %v430
    %vm432 = vcmp.eq.f32.partialorder %v374, inf
    %v433 = vsel %vm432, %v374, %v431
    %vm434 = vcmp.eq.f32.partialorder %v374, 0.0
    %v435 = vand.u32 %v374, 2147483648
    %v436 = vsel %vm434, %v435, %v433
    %v437 = vrsqrt.pop %v376
    %v438 = vmul.f32 %v376, %v437
    %vm439 = vcmp.eq.f32.partialorder %v376, inf
    %v440 = vsel %vm439, %v376, %v438
    %vm441 = vcmp.eq.f32.partialorder %v376, 0.0
    %v442 = vand.u32 %v376, 2147483648
    %v443 = vsel %vm441, %v442, %v440
    %v444 = vrsqrt.pop %v378
    %v445 = vmul.f32 %v378, %v444
    %vm446 = vcmp.eq.f32.partialorder %v378, inf
    %v447 = vsel %vm446, %v378, %v445
    %vm448 = vcmp.eq.f32.partialorder %v378, 0.0
    %v449 = vand.u32 %v378, 2147483648
    %v450 = vsel %vm448, %v449, %v447
    %v451 = vrsqrt.pop %v380
    %v452 = vmul.f32 %v380, %v451
    %vm453 = vcmp.eq.f32.partialorder %v380, inf
    %v454 = vsel %vm453, %v380, %v452
    %vm455 = vcmp.eq.f32.partialorder %v380, 0.0
    %v456 = vand.u32 %v380, 2147483648
    %v457 = vsel %vm455, %v456, %v454
    %v458 = vrsqrt.pop %v382
    %v459 = vmul.f32 %v382, %v458
    %vm460 = vcmp.eq.f32.partialorder %v382, inf
    %v461 = vsel %vm460, %v382, %v459
    %vm462 = vcmp.eq.f32.partialorder %v382, 0.0
    %v463 = vand.u32 %v382, 2147483648
    %v464 = vsel %vm462, %v463, %v461
    %v465 = vrsqrt.pop %v384
    %v466 = vmul.f32 %v384, %v465
    %vm467 = vcmp.eq.f32.partialorder %v384, inf
    %v468 = vsel %vm467, %v384, %v466
    %vm469 = vcmp.eq.f32.partialorder %v384, 0.0
    %v470 = vand.u32 %v384, 2147483648
    %v471 = vsel %vm469, %v470, %v468
    %v472 = vadd.f32 %v408, 0.0001
    %v473 = vadd.f32 %v415, 0.0001
    %v474 = vadd.f32 %v422, 0.0001
    %v475 = vadd.f32 %v429, 0.0001
    %v476 = vadd.f32 %v436, 0.0001
    %v477 = vadd.f32 %v443, 0.0001
    %v478 = vadd.f32 %v450, 0.0001
    %v479 = vadd.f32 %v457, 0.0001
    %v480 = vadd.f32 %v464, 0.0001
    %v481 = vadd.f32 %v471, 0.0001
    %v482 = vrcp.pop %v472
    %v483 = vrcp.pop %v473
    %v484 = vrcp.pop %v474
    %v485 = vrcp.pop %v475
    %v486 = vrcp.pop %v476
    %v487 = vrcp.pop %v477
    %v488 = vrcp.pop %v478
    %v489 = vrcp.pop %v479
    %v490 = vrcp.pop %v480
    %v491 = vrcp.pop %v481
    %v492 = vmul.f32 %v345, %v482
    %v493 = vmul.f32 %v346, %v483
    %v494 = vmul.f32 %v347, %v484
    %v495 = vmul.f32 %v348, %v485
    %v496 = vmul.f32 %v349, %v486
    %v497 = vmul.f32 %v350, %v487
    %v498 = vmul.f32 %v351, %v488
    %v499 = vmul.f32 %v352, %v489
    %v500 = vmul.f32 %v353, %v490
    %v501 = vmul.f32 %v354, %v491
    %v503 = vlaneseq
    %v504 = vshrl.u32 %v503, 7
    %v505 = vsub.s32 0, %v504
    %v506 = vrot.slane %v401, %v505
    %508 = vmatprep.subr.mxu0 0.0
    %509 = vmatpush1.msra.mxu0 %v385
    %510 = vmatprep.subr.mxu0 0.0
    %511 = vmatpush1.msra.mxu0 %v386
    %512 = vmatprep.subr.mxu0 0.0
    %513 = vmatpush1.msra.mxu0 %v387
    %514 = vmatprep.subr.mxu0 0.0
    %515 = vmatpush1.msra.mxu0 %v388
    %516 = vmatprep.subr.mxu0 0.0
    %517 = vmatpush1.msra.mxu0 %v389
    %518 = vmatprep.subr.mxu0 0.0
    %519 = vmatpush1.msra.mxu0 %v390
    %520 = vmatprep.subr.mxu0 0.0
    %521 = vmatpush1.msra.mxu0 %v391
    %522 = vmatprep.subr.mxu0 0.0
    %523 = vmatpush1.msra.mxu0 %v392
    %524 = vmatprep.subr.mxu0 0.0
    %525 = vmatpush1.msra.mxu0 %v393
    %526 = vmatprep.subr.mxu0 0.0
    %527 = vmatpush1.msra.mxu0 %v394
    %528 = vmatprep.subr.mxu0 0.0
    %529 = vmatpush1.msra.mxu0 %v395
    %530 = vmatprep.subr.mxu0 0.0
    %531 = vmatpush1.msra.mxu0 %v396
    %532 = vmatprep.subr.mxu0 0.0
    %533 = vmatpush1.msra.mxu0 %v397
    %534 = vmatprep.subr.mxu0 0.0
    %535 = vmatpush1.msra.mxu0 %v398
    %536 = vmatprep.subr.mxu0 0.0
    %537 = vmatpush1.msra.mxu0 %v399
    %538 = vmatprep.subr.mxu0 0.0
    %539 = vmatpush1.msra.mxu0 %v400
    %540 = vmatprep.subr.mxu0 0.0
    %541 = vmatpush1.msra.mxu0 0.0
    %542 = vmatprep.subr.mxu0 0.0
    %543 = vmatpush1.msra.mxu0 0.0
    %544 = vmatprep.subr.mxu0 0.0
    %545 = vmatpush1.msra.mxu0 0.0
    %546 = vmatprep.subr.mxu0 0.0
    %547 = vmatpush1.msra.mxu0 0.0
    %548 = vmatprep.subr.mxu0 0.0
    %549 = vmatpush1.msra.mxu0 0.0
    %550 = vmatprep.subr.mxu0 0.0
    %551 = vmatpush1.msra.mxu0 0.0
    %552 = vmatprep.subr.mxu0 0.0
    %553 = vmatpush1.msra.mxu0 0.0
    %554 = vmatprep.subr.mxu0 0.0
    %555 = vmatpush1.msra.mxu0 0.0
    %556 = vmatprep.subr.mxu0 0.0
    %557 = vmatpush1.msra.mxu0 0.0
    %558 = vmatprep.subr.mxu0 0.0
    %559 = vmatpush1.msra.mxu0 0.0
    %560 = vmatprep.subr.mxu0 0.0
    %561 = vmatpush1.msra.mxu0 0.0
    %562 = vmatprep.subr.mxu0 0.0
    %563 = vmatpush1.msra.mxu0 0.0
    %564 = vmatprep.subr.mxu0 0.0
    %565 = vmatpush1.msra.mxu0 0.0
    %566 = vmatprep.subr.mxu0 0.0
    %567 = vmatpush1.msra.mxu0 0.0
    %568 = vmatprep.subr.mxu0 0.0
    %569 = vmatpush1.msra.mxu0 0.0
    %570 = vmatprep.subr.mxu0 0.0
    %571 = vmatpush1.msra.mxu0 0.0
    %572 = vmatprep.mubr.f32.mxu0 0.0
    %573 = vmatmul.mubr.f32.gmra.mrb[0].mxu0 %v492
    %v574 = vpop.f32.mrb[0].mxu0
    %v575 = vadd.f32 %v506, %v574
    %v576 = vpop.f32.mrb[0].mxu0
    %577 = vmatprep.mubr.f32.mxu0 0.0
    %578 = vmatmul.mubr.f32.gmra.mrb[0].mxu0 %v493
    %v579 = vpop.f32.mrb[0].mxu0
    %v580 = vadd.f32 %v506, %v579
    %v581 = vpop.f32.mrb[0].mxu0
    %582 = vmatprep.mubr.f32.mxu0 0.0
    %583 = vmatmul.mubr.f32.gmra.mrb[0].mxu0 %v494
    %v584 = vpop.f32.mrb[0].mxu0
    %v585 = vadd.f32 %v506, %v584
    %v586 = vpop.f32.mrb[0].mxu0
    %587 = vmatprep.mubr.f32.mxu0 0.0
    %588 = vmatmul.mubr.f32.gmra.mrb[0].mxu0 %v495
    %v589 = vpop.f32.mrb[0].mxu0
    %v590 = vadd.f32 %v506, %v589
    %v591 = vpop.f32.mrb[0].mxu0
    %592 = vmatprep.mubr.f32.mxu0 0.0
    %593 = vmatmul.mubr.f32.gmra.mrb[0].mxu0 %v496
    %v594 = vpop.f32.mrb[0].mxu0
    %v595 = vadd.f32 %v506, %v594
    %v596 = vpop.f32.mrb[0].mxu0
    %597 = vmatprep.mubr.f32.mxu0 0.0
    %598 = vmatmul.mubr.f32.gmra.mrb[0].mxu0 %v497
    %v599 = vpop.f32.mrb[0].mxu0
    %v600 = vadd.f32 %v506, %v599
    %v601 = vpop.f32.mrb[0].mxu0
    %602 = vmatprep.mubr.f32.mxu0 0.0
    %603 = vmatmul.mubr.f32.gmra.mrb[0].mxu0 %v498
    %v604 = vpop.f32.mrb[0].mxu0
    %v605 = vadd.f32 %v506, %v604
    %v606 = vpop.f32.mrb[0].mxu0
    %607 = vmatprep.mubr.f32.mxu0 0.0
    %608 = vmatmul.mubr.f32.gmra.mrb[0].mxu0 %v499
    %v609 = vpop.f32.mrb[0].mxu0
    %v610 = vadd.f32 %v506, %v609
    %v611 = vpop.f32.mrb[0].mxu0
    %612 = vmatprep.mubr.f32.mxu0 0.0
    %613 = vmatmul.mubr.f32.gmra.mrb[0].mxu0 %v500
    %v614 = vpop.f32.mrb[0].mxu0
    %v615 = vadd.f32 %v506, %v614
    %v616 = vpop.f32.mrb[0].mxu0
    %617 = vmatprep.mubr.f32.mxu0 0.0
    %618 = vmatmul.mubr.f32.gmra.mrb[0].mxu0 %v501
    %v619 = vpop.f32.mrb[0].mxu0
    %v620 = vadd.f32 %v506, %v619
    %v621 = vpop.f32.mrb[0].mxu0
    %622 = vdwg.mxu0
    %v623 = vmax.f32 %v575, 0.0
    %v624 = vmax.f32 %v580, 0.0
    %v625 = vmax.f32 %v585, 0.0
    %v626 = vmax.f32 %v590, 0.0
    %v627 = vmax.f32 %v595, 0.0
    %v628 = vmax.f32 %v600, 0.0
    %v629 = vmax.f32 %v605, 0.0
    %v630 = vmax.f32 %v610, 0.0
    %v631 = vmax.f32 %v615, 0.0
    %v632 = vmax.f32 %v620, 0.0
    %v633 = vmul.f32 %v623, %v623
    %v634 = vmul.f32 %v624, %v624
    %v635 = vmul.f32 %v625, %v625
    %v636 = vmul.f32 %v626, %v626
    %v637 = vmul.f32 %v627, %v627
    %v638 = vmul.f32 %v628, %v628
    %v639 = vmul.f32 %v629, %v629
    %v640 = vmul.f32 %v630, %v630
    %v641 = vmul.f32 %v631, %v631
    %v642 = vmul.f32 %v632, %v632
    %643 = vadd.xlane.f32.xlu0 %v633
    %v644 = vpop.xlane.xlu0 %643
    %645 = vadd.xlane.f32.xlu0 %v634
    %v646 = vpop.xlane.xlu0 %645
    %647 = vadd.xlane.f32.xlu0 %v635
    %v648 = vpop.xlane.xlu0 %647
    %649 = vadd.xlane.f32.xlu0 %v636
    %v650 = vpop.xlane.xlu0 %649
    %651 = vadd.xlane.f32.xlu0 %v637
    %v652 = vpop.xlane.xlu0 %651
    %653 = vadd.xlane.f32.xlu0 %v638
    %v654 = vpop.xlane.xlu0 %653
    %655 = vadd.xlane.f32.xlu0 %v639
    %v656 = vpop.xlane.xlu0 %655
    %657 = vadd.xlane.f32.xlu0 %v640
    %v658 = vpop.xlane.xlu0 %657
    %659 = vadd.xlane.f32.xlu0 %v641
    %v660 = vpop.xlane.xlu0 %659
    %661 = vadd.xlane.f32.xlu0 %v642
    %v662 = vpop.xlane.xlu0 %661
    %v663 = vmul.f32 %v644, 0.0078125
    %v664 = vmul.f32 %v646, 0.0078125
    %v665 = vmul.f32 %v648, 0.0078125
    %v666 = vmul.f32 %v650, 0.0078125
    %v667 = vmul.f32 %v652, 0.0078125
    %v668 = vmul.f32 %v654, 0.0078125
    %v669 = vmul.f32 %v656, 0.0078125
    %v670 = vmul.f32 %v658, 0.0078125
    %v671 = vmul.f32 %v660, 0.0078125
    %v672 = vmul.f32 %v662, 0.0078125
    %v673 = vadd.f32 %v663, 0.0
    %v674 = vadd.f32 %v664, 0.0
    %v675 = vadd.f32 %v665, 0.0
    %v676 = vadd.f32 %v666, 0.0
    %v677 = vadd.f32 %v667, 0.0
    %v678 = vadd.f32 %v668, 0.0
    %v679 = vadd.f32 %v669, 0.0
    %v680 = vadd.f32 %v670, 0.0
    %v681 = vadd.f32 %v671, 0.0
    %v682 = vadd.f32 %v672, 0.0
    %v683 = vld [vmem:[#allocation7] sm:$0xff]
    %v684 = vld [vmem:[#allocation7 + $0x8] sm:$0xff]
    %v685 = vld [vmem:[#allocation7 + $0x10] sm:$0xff]
    %v686 = vld [vmem:[#allocation7 + $0x18] sm:$0xff]
    %v687 = vld [vmem:[#allocation7 + $0x20] sm:$0xff]
    %v688 = vld [vmem:[#allocation7 + $0x28] sm:$0xff]
    %v689 = vld [vmem:[#allocation7 + $0x30] sm:$0xff]
    %v690 = vld [vmem:[#allocation7 + $0x38] sm:$0xff]
    %v691 = vld [vmem:[#allocation7 + $0x40] sm:$0xff]
    %v692 = vld [vmem:[#allocation7 + $0x48] sm:$0xff]
    %v693 = vld [vmem:[#allocation7 + $0x50] sm:$0xff]
    %v694 = vld [vmem:[#allocation7 + $0x58] sm:$0xff]
    %v695 = vld [vmem:[#allocation7 + $0x60] sm:$0xff]
    %v696 = vld [vmem:[#allocation7 + $0x68] sm:$0xff]
    %v697 = vld [vmem:[#allocation7 + $0x70] sm:$0xff]
    %v698 = vld [vmem:[#allocation7 + $0x78] sm:$0xff]
    %v699 = vld [vmem:[%s6] sm:$0x1]
    %v700 = vrsqrt.pop %v644
    %v701 = vmul.f32 %v644, %v700
    %vm702 = vcmp.eq.f32.partialorder %v644, inf
    %v703 = vsel %vm702, %v644, %v701
    %vm704 = vcmp.eq.f32.partialorder %v644, 0.0
    %v705 = vand.u32 %v644, 2147483648
    %v706 = vsel %vm704, %v705, %v703
    %v707 = vrsqrt.pop %v646
    %v708 = vmul.f32 %v646, %v707
    %vm709 = vcmp.eq.f32.partialorder %v646, inf
    %v710 = vsel %vm709, %v646, %v708
    %vm711 = vcmp.eq.f32.partialorder %v646, 0.0
    %v712 = vand.u32 %v646, 2147483648
    %v713 = vsel %vm711, %v712, %v710
    %v714 = vrsqrt.pop %v648
    %v715 = vmul.f32 %v648, %v714
    %vm716 = vcmp.eq.f32.partialorder %v648, inf
    %v717 = vsel %vm716, %v648, %v715
    %vm718 = vcmp.eq.f32.partialorder %v648, 0.0
    %v719 = vand.u32 %v648, 2147483648
    %v720 = vsel %vm718, %v719, %v717
    %v721 = vrsqrt.pop %v650
    %v722 = vmul.f32 %v650, %v721
    %vm723 = vcmp.eq.f32.partialorder %v650, inf
    %v724 = vsel %vm723, %v650, %v722
    %vm725 = vcmp.eq.f32.partialorder %v650, 0.0
    %v726 = vand.u32 %v650, 2147483648
    %v727 = vsel %vm725, %v726, %v724
    %v728 = vrsqrt.pop %v652
    %v729 = vmul.f32 %v652, %v728
    %vm730 = vcmp.eq.f32.partialorder %v652, inf
    %v731 = vsel %vm730, %v652, %v729
    %vm732 = vcmp.eq.f32.partialorder %v652, 0.0
    %v733 = vand.u32 %v652, 2147483648
    %v734 = vsel %vm732, %v733, %v731
    %v735 = vrsqrt.pop %v654
    %v736 = vmul.f32 %v654, %v735
    %vm737 = vcmp.eq.f32.partialorder %v654, inf
    %v738 = vsel %vm737, %v654, %v736
    %vm739 = vcmp.eq.f32.partialorder %v654, 0.0
    %v740 = vand.u32 %v654, 2147483648
    %v741 = vsel %vm739, %v740, %v738
    %v742 = vrsqrt.pop %v656
    %v743 = vmul.f32 %v656, %v742
    %vm744 = vcmp.eq.f32.partialorder %v656, inf
    %v745 = vsel %vm744, %v656, %v743
    %vm746 = vcmp.eq.f32.partialorder %v656, 0.0
    %v747 = vand.u32 %v656, 2147483648
    %v748 = vsel %vm746, %v747, %v745
    %v749 = vrsqrt.pop %v658
    %v750 = vmul.f32 %v658, %v749
    %vm751 = vcmp.eq.f32.partialorder %v658, inf
    %v752 = vsel %vm751, %v658, %v750
    %vm753 = vcmp.eq.f32.partialorder %v658, 0.0
    %v754 = vand.u32 %v658, 2147483648
    %v755 = vsel %vm753, %v754, %v752
    %v756 = vrsqrt.pop %v660
    %v757 = vmul.f32 %v660, %v756
    %vm758 = vcmp.eq.f32.partialorder %v660, inf
    %v759 = vsel %vm758, %v660, %v757
    %vm760 = vcmp.eq.f32.partialorder %v660, 0.0
    %v761 = vand.u32 %v660, 2147483648
    %v762 = vsel %vm760, %v761, %v759
    %v763 = vrsqrt.pop %v662
    %v764 = vmul.f32 %v662, %v763
    %vm765 = vcmp.eq.f32.partialorder %v662, inf
    %v766 = vsel %vm765, %v662, %v764
    %vm767 = vcmp.eq.f32.partialorder %v662, 0.0
    %v768 = vand.u32 %v662, 2147483648
    %v769 = vsel %vm767, %v768, %v766
    %v770 = vadd.f32 %v706, 0.0001
    %v771 = vadd.f32 %v713, 0.0001
    %v772 = vadd.f32 %v720, 0.0001
    %v773 = vadd.f32 %v727, 0.0001
    %v774 = vadd.f32 %v734, 0.0001
    %v775 = vadd.f32 %v741, 0.0001
    %v776 = vadd.f32 %v748, 0.0001
    %v777 = vadd.f32 %v755, 0.0001
    %v778 = vadd.f32 %v762, 0.0001
    %v779 = vadd.f32 %v769, 0.0001
    %v780 = vrcp.pop %v770
    %v781 = vrcp.pop %v771
    %v782 = vrcp.pop %v772
    %v783 = vrcp.pop %v773
    %v784 = vrcp.pop %v774
    %v785 = vrcp.pop %v775
    %v786 = vrcp.pop %v776
    %v787 = vrcp.pop %v777
    %v788 = vrcp.pop %v778
    %v789 = vrcp.pop %v779
    %v790 = vmul.f32 %v623, %v780
    %v791 = vmul.f32 %v624, %v781
    %v792 = vmul.f32 %v625, %v782
    %v793 = vmul.f32 %v626, %v783
    %v794 = vmul.f32 %v627, %v784
    %v795 = vmul.f32 %v628, %v785
    %v796 = vmul.f32 %v629, %v786
    %v797 = vmul.f32 %v630, %v787
    %v798 = vmul.f32 %v631, %v788
    %v799 = vmul.f32 %v632, %v789
    %v801 = vlaneseq
    %v802 = vshrl.u32 %v801, 7
    %v803 = vsub.s32 0, %v802
    %v804 = vrot.slane %v699, %v803
    %806 = vmatprep.subr.mxu0 0.0
    %807 = vmatpush1.msra.mxu0 %v683
    %808 = vmatprep.subr.mxu0 0.0
    %809 = vmatpush1.msra.mxu0 %v684
    %810 = vmatprep.subr.mxu0 0.0
    %811 = vmatpush1.msra.mxu0 %v685
    %812 = vmatprep.subr.mxu0 0.0
    %813 = vmatpush1.msra.mxu0 %v686
    %814 = vmatprep.subr.mxu0 0.0
    %815 = vmatpush1.msra.mxu0 %v687
    %816 = vmatprep.subr.mxu0 0.0
    %817 = vmatpush1.msra.mxu0 %v688
    %818 = vmatprep.subr.mxu0 0.0
    %819 = vmatpush1.msra.mxu0 %v689
    %820 = vmatprep.subr.mxu0 0.0
    %821 = vmatpush1.msra.mxu0 %v690
    %822 = vmatprep.subr.mxu0 0.0
    %823 = vmatpush1.msra.mxu0 %v691
    %824 = vmatprep.subr.mxu0 0.0
    %825 = vmatpush1.msra.mxu0 %v692
    %826 = vmatprep.subr.mxu0 0.0
    %827 = vmatpush1.msra.mxu0 %v693
    %828 = vmatprep.subr.mxu0 0.0
    %829 = vmatpush1.msra.mxu0 %v694
    %830 = vmatprep.subr.mxu0 0.0
    %831 = vmatpush1.msra.mxu0 %v695
    %832 = vmatprep.subr.mxu0 0.0
    %833 = vmatpush1.msra.mxu0 %v696
    %834 = vmatprep.subr.mxu0 0.0
    %835 = vmatpush1.msra.mxu0 %v697
    %836 = vmatprep.subr.mxu0 0.0
    %837 = vmatpush1.msra.mxu0 %v698
    %838 = vmatprep.subr.mxu0 0.0
    %839 = vmatpush1.msra.mxu0 0.0
    %840 = vmatprep.subr.mxu0 0.0
    %841 = vmatpush1.msra.mxu0 0.0
    %842 = vmatprep.subr.mxu0 0.0
    %843 = vmatpush1.msra.mxu0 0.0
    %844 = vmatprep.subr.mxu0 0.0
    %845 = vmatpush1.msra.mxu0 0.0
    %846 = vmatprep.subr.mxu0 0.0
    %847 = vmatpush1.msra.mxu0 0.0
    %848 = vmatprep.subr.mxu0 0.0
    %849 = vmatpush1.msra.mxu0 0.0
    %850 = vmatprep.subr.mxu0 0.0
    %851 = vmatpush1.msra.mxu0 0.0
    %852 = vmatprep.subr.mxu0 0.0
    %853 = vmatpush1.msra.mxu0 0.0
    %854 = vmatprep.subr.mxu0 0.0
    %855 = vmatpush1.msra.mxu0 0.0
    %856 = vmatprep.subr.mxu0 0.0
    %857 = vmatpush1.msra.mxu0 0.0
    %858 = vmatprep.subr.mxu0 0.0
    %859 = vmatpush1.msra.mxu0 0.0
    %860 = vmatprep.subr.mxu0 0.0
    %861 = vmatpush1.msra.mxu0 0.0
    %862 = vmatprep.subr.mxu0 0.0
    %863 = vmatpush1.msra.mxu0 0.0
    %864 = vmatprep.subr.mxu0 0.0
    %865 = vmatpush1.msra.mxu0 0.0
    %866 = vmatprep.subr.mxu0 0.0
    %867 = vmatpush1.msra.mxu0 0.0
    %868 = vmatprep.subr.mxu0 0.0
    %869 = vmatpush1.msra.mxu0 0.0
    %870 = vmatprep.mubr.f32.mxu0 0.0
    %871 = vmatmul.mubr.f32.gmra.mrb[0].mxu0 %v790
    %v872 = vpop.f32.mrb[0].mxu0
    %v873 = vadd.f32 %v804, %v872
    %v874 = vpop.f32.mrb[0].mxu0
    %875 = vmatprep.mubr.f32.mxu0 0.0
    %876 = vmatmul.mubr.f32.gmra.mrb[0].mxu0 %v791
    %v877 = vpop.f32.mrb[0].mxu0
    %v878 = vadd.f32 %v804, %v877
    %v879 = vpop.f32.mrb[0].mxu0
    %880 = vmatprep.mubr.f32.mxu0 0.0
    %881 = vmatmul.mubr.f32.gmra.mrb[0].mxu0 %v792
    %v882 = vpop.f32.mrb[0].mxu0
    %v883 = vadd.f32 %v804, %v882
    %v884 = vpop.f32.mrb[0].mxu0
    %885 = vmatprep.mubr.f32.mxu0 0.0
    %886 = vmatmul.mubr.f32.gmra.mrb[0].mxu0 %v793
    %v887 = vpop.f32.mrb[0].mxu0
    %v888 = vadd.f32 %v804, %v887
    %v889 = vpop.f32.mrb[0].mxu0
    %890 = vmatprep.mubr.f32.mxu0 0.0
    %891 = vmatmul.mubr.f32.gmra.mrb[0].mxu0 %v794
    %v892 = vpop.f32.mrb[0].mxu0
    %v893 = vadd.f32 %v804, %v892
    %v894 = vpop.f32.mrb[0].mxu0
    %895 = vmatprep.mubr.f32.mxu0 0.0
    %896 = vmatmul.mubr.f32.gmra.mrb[0].mxu0 %v795
    %v897 = vpop.f32.mrb[0].mxu0
    %v898 = vadd.f32 %v804, %v897
    %v899 = vpop.f32.mrb[0].mxu0
    %900 = vmatprep.mubr.f32.mxu0 0.0
    %901 = vmatmul.mubr.f32.gmra.mrb[0].mxu0 %v796
    %v902 = vpop.f32.mrb[0].mxu0
    %v903 = vadd.f32 %v804, %v902
    %v904 = vpop.f32.mrb[0].mxu0
    %905 = vmatprep.mubr.f32.mxu0 0.0
    %906 = vmatmul.mubr.f32.gmra.mrb[0].mxu0 %v797
    %v907 = vpop.f32.mrb[0].mxu0
    %v908 = vadd.f32 %v804, %v907
    %v909 = vpop.f32.mrb[0].mxu0
    %910 = vmatprep.mubr.f32.mxu0 0.0
    %911 = vmatmul.mubr.f32.gmra.mrb[0].mxu0 %v798
    %v912 = vpop.f32.mrb[0].mxu0
    %v913 = vadd.f32 %v804, %v912
    %v914 = vpop.f32.mrb[0].mxu0
    %915 = vmatprep.mubr.f32.mxu0 0.0
    %916 = vmatmul.mubr.f32.gmra.mrb[0].mxu0 %v799
    %v917 = vpop.f32.mrb[0].mxu0
    %v918 = vadd.f32 %v804, %v917
    %v919 = vpop.f32.mrb[0].mxu0
    %920 = vdwg.mxu0
    %v921 = vmax.f32 %v873, 0.0
    %v922 = vmax.f32 %v878, 0.0
    %v923 = vmax.f32 %v883, 0.0
    %v924 = vmax.f32 %v888, 0.0
    %v925 = vmax.f32 %v893, 0.0
    %v926 = vmax.f32 %v898, 0.0
    %v927 = vmax.f32 %v903, 0.0
    %v928 = vmax.f32 %v908, 0.0
    %v929 = vmax.f32 %v913, 0.0
    %v930 = vmax.f32 %v918, 0.0
    %v931 = vmul.f32 %v921, %v921
    %v932 = vmul.f32 %v922, %v922
    %v933 = vmul.f32 %v923, %v923
    %v934 = vmul.f32 %v924, %v924
    %v935 = vmul.f32 %v925, %v925
    %v936 = vmul.f32 %v926, %v926
    %v937 = vmul.f32 %v927, %v927
    %v938 = vmul.f32 %v928, %v928
    %v939 = vmul.f32 %v929, %v929
    %v940 = vmul.f32 %v930, %v930
    %941 = vadd.xlane.f32.xlu0 %v931
    %v942 = vpop.xlane.xlu0 %941
    %943 = vadd.xlane.f32.xlu0 %v932
    %v944 = vpop.xlane.xlu0 %943
    %945 = vadd.xlane.f32.xlu0 %v933
    %v946 = vpop.xlane.xlu0 %945
    %947 = vadd.xlane.f32.xlu0 %v934
    %v948 = vpop.xlane.xlu0 %947
    %949 = vadd.xlane.f32.xlu0 %v935
    %v950 = vpop.xlane.xlu0 %949
    %951 = vadd.xlane.f32.xlu0 %v936
    %v952 = vpop.xlane.xlu0 %951
    %953 = vadd.xlane.f32.xlu0 %v937
    %v954 = vpop.xlane.xlu0 %953
    %955 = vadd.xlane.f32.xlu0 %v938
    %v956 = vpop.xlane.xlu0 %955
    %957 = vadd.xlane.f32.xlu0 %v939
    %v958 = vpop.xlane.xlu0 %957
    %959 = vadd.xlane.f32.xlu0 %v940
    %v960 = vpop.xlane.xlu0 %959
    %v961 = vmul.f32 %v942, 0.0078125
    %v962 = vmul.f32 %v944, 0.0078125
    %v963 = vmul.f32 %v946, 0.0078125
    %v964 = vmul.f32 %v948, 0.0078125
    %v965 = vmul.f32 %v950, 0.0078125
    %v966 = vmul.f32 %v952, 0.0078125
    %v967 = vmul.f32 %v954, 0.0078125
    %v968 = vmul.f32 %v956, 0.0078125
    %v969 = vmul.f32 %v958, 0.0078125
    %v970 = vmul.f32 %v960, 0.0078125
    %v971 = vadd.f32 %v673, %v961
    %v972 = vadd.f32 %v674, %v962
    %v973 = vadd.f32 %v675, %v963
    %v974 = vadd.f32 %v676, %v964
    %v975 = vadd.f32 %v677, %v965
    %v976 = vadd.f32 %v678, %v966
    %v977 = vadd.f32 %v679, %v967
    %v978 = vadd.f32 %v680, %v968
    %v979 = vadd.f32 %v681, %v969
    %v980 = vadd.f32 %v682, %v970
    %vm981 = vcmask 7168
    %982 = vst.msk [vmem:[%s7] sm:$0xff] %vm981, %v971
    %983 = vst.msk [vmem:[%s7 + $0x8] sm:$0xff] %vm981, %v972
    %984 = vst.msk [vmem:[%s7 + $0x10] sm:$0xff] %vm981, %v973
    %985 = vst.msk [vmem:[%s7 + $0x18] sm:$0xff] %vm981, %v974
    %986 = vst.msk [vmem:[%s7 + $0x20] sm:$0xff] %vm981, %v975
    %987 = vst.msk [vmem:[%s7 + $0x28] sm:$0xff] %vm981, %v976
    %988 = vst.msk [vmem:[%s7 + $0x30] sm:$0xff] %vm981, %v977
    %989 = vst.msk [vmem:[%s7 + $0x38] sm:$0xff] %vm981, %v978
    %990 = vst.msk [vmem:[%s7 + $0x40] sm:$0xff] %vm981, %v979
    %991 = vst.msk [vmem:[%s7 + $0x48] sm:$0xff] %vm981, %v980
    // Predicated region
    $region46: #{ffbasenet_forward.1} parent=1 // pred_check
      _
    $region47: #{ffbasenet_forward.1} parent=1 // pred_check_branch
      %993 = sbr.rel (0) target = $region49
    $region48: #{ffbasenet_forward.1} parent=1 // pred_region
      _
    $region49: #{ffbasenet_forward.1} parent=1 // pred_fallthru
      _
    // Predicated region
    $region50: #{ffbasenet_forward.1} parent=1 // pred_check
      _
    $region51: #{ffbasenet_forward.1} parent=1 // pred_check_branch
      %995 = sbr.rel (0) target = $region53
    $region52: #{ffbasenet_forward.1} parent=1 // pred_region
      _
    $region53: #{ffbasenet_forward.1} parent=1 // pred_fallthru
      _
    %996 = vsyncpa [#allocation3], 1
    %997 = vsyncpa [#allocation5], 1
    %998 = vsyncpa [#allocation8], 1

</llo_original>
